<compile_context>
chip_gen: v7x
topology: tpu7x:2x2x1
jax: 0.10.0
libtpu: 0.0.40
codegen_flags: <defaults>
</compile_context>

<pallas_src>
import math
from functools import partial

import jax
import jax.numpy as jnp
from jax.experimental import pallas as pl
from jax.experimental.pallas import tpu as pltpu


H = 128   # padded hidden width (every layer dim <= 128)
K0 = 16   # padded input-feature width (obs_dim + act_dim = 15 -> 16)

# "NT" contraction: contract the last dim of both operands (A @ B^T on the MXU).
_NT_DIMS = (((1,), (1,)), ((), ()))


# ----------------------------- Pallas kernel ------------------------------

def qv1_kernel(x_ref, w_ref, b_ref, out_ref, *, k0):
    """Whole critic MLP on one batch tile.

    x_ref  : [TB, k0]      bf16  concat(obs, action) zero-padded to k0 lanes
    w_ref  : [6, 128, 128] bf16  zero-padded stacked weights; layers 0..4 in
                                 x @ W layout, last layer stored transposed
    b_ref  : [6, 1, 128]   f32   zero-padded stacked biases
    out_ref: [1, 1, TB]    f32   lane-dense row of Q values for this tile
    """
    n = w_ref.shape[0]

    # Layer 0: K = k0 real feature lanes; rows k0..127 of padded W0 are zero,
    # so the K=16 matmul is exact.
    w0 = w_ref[0, 0:k0, :]                                        # [k0, 128]
    y = jnp.dot(x_ref[...], w0, preferred_element_type=jnp.float32) + b_ref[0]
    x = jnp.maximum(y, 0.0).astype(jnp.bfloat16)                  # [TB, 128]

    # Hidden layers 1..n-2 (Linear + ReLU), f32 accumulate, bf16 back to MXU.
    for i in range(1, n - 1):
        y = jnp.dot(x, w_ref[i], preferred_element_type=jnp.float32) + b_ref[i]
        x = jnp.maximum(y, 0.0).astype(jnp.bfloat16)

    # Final layer, lane-dense: W_last is stored transposed, so row 0 of its
    # 128x128 slot holds W_last[:, 0] (rows 1..15 are zero).  Contract on the
    # feature dim of both operands -> q[r, b]; only row 0 is meaningful.
    w_last = w_ref[n - 1, 0:16, :]                                # [16, 128]
    q = jax.lax.dot_general(w_last, x, _NT_DIMS,
                            preferred_element_type=jnp.float32)   # [16, TB]
    b_last = b_ref[n - 1]                                         # [1, 128]
    out_ref[0] = q[0:1, :] + b_last[0:1, 0:1]


# ------------------------------ wrapper -----------------------------------

def _round_up(x, m):
    return ((x + m - 1) // m) * m


def _choose_tiling(batch, cap=512):
    """Return (tile_rows, n_steps, padded_batch).

    n_steps is always even and >= 2 so dimension_semantics=("parallel",) lets
    v7x split the batch grid across its two TensorCores (no-op on v5e/v6e);
    tile_rows is a multiple of 16 (bf16 sublane packing) capped at `cap`.
    """
    bp = _round_up(max(batch, 1), 16)
    n_steps = max(2, -(-bp // cap))
    if n_steps % 2:
        n_steps += 1
    tb = _round_up(-(-bp // n_steps), 16)
    return tb, n_steps, tb * n_steps


def pack_params(params):
    """Zero-pad and stack the (W [in,out], b [1,out]) pairs.

    Layers 0..n-2 are stored in x @ W layout; the LAST layer is stored
    transposed (row 0 of its slot = W[:, 0]) so the kernel can emit a
    lane-dense [1, TB] output row straight from the MXU.
    """
    n = len(params)
    w_stack = jnp.zeros((n, H, H), jnp.float32)
    b_stack = jnp.zeros((n, 1, H), jnp.float32)
    for i, (w, b) in enumerate(params):
        if i == n - 1:
            w_stack = w_stack.at[i, : w.shape[1], : w.shape[0]].set(w.T)
        else:
            w_stack = w_stack.at[i, : w.shape[0], : w.shape[1]].set(w)
        b_stack = b_stack.at[i, :, : b.shape[1]].set(b)
    return w_stack.astype(jnp.bfloat16), b_stack


def qv1_forward(obs, action, w_stack, b_stack, *, tile_cap=512):
    """obs [B, obs_dim] f32, action [B, act_dim] f32 -> Q values [B] f32."""
    B = obs.shape[0]
    in_dim = obs.shape[-1] + action.shape[-1]
    assert in_dim <= K0, "input feature width exceeds the packed K0 lanes"

    tb, n_steps, bp = _choose_tiling(B, cap=tile_cap)
    n_layers = w_stack.shape[0]

    # Only a [Bp, 16] bf16 staging array (32 B/row): the 128-lane padding is
    # never materialized; zero lanes/rows stay exactly zero through the MLP.
    x = jnp.concatenate([obs, action], axis=-1).astype(jnp.bfloat16)
    x16 = jnp.zeros((bp, K0), jnp.bfloat16).at[:B, :in_dim].set(x)

    flops = 2 * bp * (K0 * H + (n_layers - 2) * H * H + 16 * H)
    bytes_accessed = (x16.size * 2 + w_stack.size * 2 + b_stack.size * 4
                      + n_steps * tb * 4)

    out = pl.pallas_call(
        partial(qv1_kernel, k0=K0),
        out_shape=jax.ShapeDtypeStruct((n_steps, 1, tb), jnp.float32),
        grid=(n_steps,),
        in_specs=[
            pl.BlockSpec((tb, K0), lambda i: (i, 0)),               # batch tile
            pl.BlockSpec((n_layers, H, H), lambda i: (0, 0, 0)),    # all weights
            pl.BlockSpec((n_layers, 1, H), lambda i: (0, 0, 0)),    # all biases
        ],
        out_specs=pl.BlockSpec((1, 1, tb), lambda i: (i, 0, 0)),    # [1,TB] rows
        compiler_params=pltpu.CompilerParams(
            dimension_semantics=("parallel",)),
        cost_estimate=pl.CostEstimate(
            flops=flops, transcendentals=0, bytes_accessed=bytes_accessed),
    )(x16, w_stack, b_stack)

    # Row i of the output holds Q for batch rows [i*tb, (i+1)*tb).
    return out.reshape(-1)[:B]     # == torch.squeeze(mlp(cat(obs, act)), -1)


# -------------------------- parameter creation -----------------------------

def make_params(key, dims):
    """Deterministic init mimicking nn.Linear default (U[-1/sqrt(fan_in), +])."""
    params = []
    for fan_in, fan_out in zip(dims[:-1], dims[1:]):
        key, kw, kb = jax.random.split(key, 3)
        bound = 1.0 / math.sqrt(fan_in)
        w = jax.random.uniform(kw, (fan_in, fan_out), jnp.float32, -bound, bound)
        b = jax.random.uniform(kb, (1, fan_out), jnp.float32, -bound, bound)
        params.append((w, b))
    return params


def reference_forward(obs, action, params):
    """Pure-JAX reference mirroring the kernel's bf16-operand / f32-accumulate math."""
    x = jnp.concatenate([obs, action], axis=-1)
    n = len(params)
    for i, (w, b) in enumerate(params):
        xb = x.astype(jnp.bfloat16).astype(jnp.float32)
        wb = w.astype(jnp.bfloat16).astype(jnp.float32)
        x = jnp.dot(xb, wb, precision=jax.lax.Precision.HIGHEST) + b
        if i < n - 1:
            x = jnp.maximum(x, 0.0)
    return x[:, 0]


# --------------------------------- main ------------------------------------

if __name__ == "__main__":
    OBS_DIM = 12   # [e_pitch, e_roll, e_spd, traj_pitch, traj_roll, traj_spd,
                   #  d_roll, d_pitch, d_spd, i_roll, i_pitch, i_spd]
    ACT_DIM = 3    # [d_elev, d_ail, d_thrust]
    BATCH = 8

    dims = [OBS_DIM + ACT_DIM, 32, 64, 128, 64, 32, 1]

    key = jax.random.PRNGKey(0)
    key, k_obs, k_act = jax.random.split(key, 3)
    obs = jax.random.normal(k_obs, (BATCH, OBS_DIM), dtype=jnp.float32)
    action = jax.random.normal(k_act, (BATCH, ACT_DIM), dtype=jnp.float32)
    params = make_params(key, dims)

    w_stack, b_stack = pack_params(params)
    fwd = jax.jit(qv1_forward)
    out = jax.block_until_ready(fwd(obs, action, w_stack, b_stack))

    ref = reference_forward(obs, action, params)
    assert out.shape == (BATCH,)
    assert jnp.allclose(out, ref, atol=1e-3, rtol=1e-3), (
        f"mismatch vs reference, max abs diff = {jnp.max(jnp.abs(out - ref))}")

    print("KERNEL_OK")
</pallas_src>

<mosaic_0001>
module attributes {stable_mosaic.version = 11 : i64} {
  func.func @qv1_kernel(%arg0: i32, %arg1: memref<16x16xbf16, #tpu.memory_space<vmem>>, %arg2: memref<6x128x128xbf16, #tpu.memory_space<vmem>>, %arg3: memref<6x1x128xf32, #tpu.memory_space<vmem>>, %arg4: memref<1x1x16xf32, #tpu.memory_space<vmem>>) attributes {dimension_semantics = [#tpu.dimension_semantics<parallel>], iteration_bounds = array<i64: 2>, scalar_prefetch = 0 : i64, scratch_operands = 0 : i64, tpu.core_type = #tpu.core_type<tc>, window_params = [{transform_indices = @transform_0, window_bounds = array<i64: 16, 16>}, {pipeline_mode = #tpu.pipeline_mode<synchronous>, transform_indices = @transform_1, window_bounds = array<i64: 6, 128, 128>}, {pipeline_mode = #tpu.pipeline_mode<synchronous>, transform_indices = @transform_2, window_bounds = array<i64: 6, 1, 128>}, {transform_indices = @transform_3, window_bounds = array<i64: 1, 1, 16>}]} {
    %c0 = arith.constant 0 : index
    %c0_0 = arith.constant 0 : index
    %c0_1 = arith.constant 0 : index
    %0 = vector.load %arg2[%c0, %c0_0, %c0_1] : memref<6x128x128xbf16, #tpu.memory_space<vmem>>, vector<1x16x128xbf16>
    %1 = vector.shape_cast %0 : vector<1x16x128xbf16> to vector<16x128xbf16>
    %c0_2 = arith.constant 0 : index
    %c0_3 = arith.constant 0 : index
    %2 = vector.load %arg1[%c0_2, %c0_3] : memref<16x16xbf16, #tpu.memory_space<vmem>>, vector<16x16xbf16>
    %cst = arith.constant dense<0.000000e+00> : vector<16x128xf32>
    %3 = tpu.matmul %2, %1, %cst {dimension_numbers = #tpu.dot_dimension_numbers<[1], [0], [0], [1], [0, 0, 1, 1], [], []>} : vector<16x16xbf16>, vector<16x128xbf16>, vector<16x128xf32> -> vector<16x128xf32>
    %c0_4 = arith.constant 0 : index
    %c0_5 = arith.constant 0 : index
    %c0_6 = arith.constant 0 : index
    %4 = vector.load %arg3[%c0_4, %c0_5, %c0_6] : memref<6x1x128xf32, #tpu.memory_space<vmem>>, vector<1x1x128xf32>
    %5 = vector.shape_cast %4 : vector<1x1x128xf32> to vector<1x128xf32>
    %6 = vector.broadcast %5 : vector<1x128xf32> to vector<16x128xf32>
    %7 = arith.addf %3, %6 : vector<16x128xf32>
    %cst_7 = arith.constant 0.000000e+00 : f32
    %8 = vector.broadcast %cst_7 : f32 to vector<16x128xf32>
    %9 = arith.maximumf %7, %8 : vector<16x128xf32>
    %10 = arith.truncf %9 : vector<16x128xf32> to vector<16x128xbf16>
    %c1 = arith.constant 1 : index
    %c0_8 = arith.constant 0 : index
    %c0_9 = arith.constant 0 : index
    %11 = vector.load %arg2[%c1, %c0_8, %c0_9] : memref<6x128x128xbf16, #tpu.memory_space<vmem>>, vector<1x128x128xbf16>
    %12 = vector.shape_cast %11 : vector<1x128x128xbf16> to vector<128x128xbf16>
    %cst_10 = arith.constant dense<0.000000e+00> : vector<16x128xf32>
    %13 = tpu.matmul %10, %12, %cst_10 {dimension_numbers = #tpu.dot_dimension_numbers<[1], [0], [0], [1], [0, 0, 1, 1], [], []>} : vector<16x128xbf16>, vector<128x128xbf16>, vector<16x128xf32> -> vector<16x128xf32>
    %c1_11 = arith.constant 1 : index
    %c0_12 = arith.constant 0 : index
    %c0_13 = arith.constant 0 : index
    %14 = vector.load %arg3[%c1_11, %c0_12, %c0_13] : memref<6x1x128xf32, #tpu.memory_space<vmem>>, vector<1x1x128xf32>
    %15 = vector.shape_cast %14 : vector<1x1x128xf32> to vector<1x128xf32>
    %16 = vector.broadcast %15 : vector<1x128xf32> to vector<16x128xf32>
    %17 = arith.addf %13, %16 : vector<16x128xf32>
    %cst_14 = arith.constant 0.000000e+00 : f32
    %18 = vector.broadcast %cst_14 : f32 to vector<16x128xf32>
    %19 = arith.maximumf %17, %18 : vector<16x128xf32>
    %20 = arith.truncf %19 : vector<16x128xf32> to vector<16x128xbf16>
    %c2 = arith.constant 2 : index
    %c0_15 = arith.constant 0 : index
    %c0_16 = arith.constant 0 : index
    %21 = vector.load %arg2[%c2, %c0_15, %c0_16] : memref<6x128x128xbf16, #tpu.memory_space<vmem>>, vector<1x128x128xbf16>
    %22 = vector.shape_cast %21 : vector<1x128x128xbf16> to vector<128x128xbf16>
    %cst_17 = arith.constant dense<0.000000e+00> : vector<16x128xf32>
    %23 = tpu.matmul %20, %22, %cst_17 {dimension_numbers = #tpu.dot_dimension_numbers<[1], [0], [0], [1], [0, 0, 1, 1], [], []>} : vector<16x128xbf16>, vector<128x128xbf16>, vector<16x128xf32> -> vector<16x128xf32>
    %c2_18 = arith.constant 2 : index
    %c0_19 = arith.constant 0 : index
    %c0_20 = arith.constant 0 : index
    %24 = vector.load %arg3[%c2_18, %c0_19, %c0_20] : memref<6x1x128xf32, #tpu.memory_space<vmem>>, vector<1x1x128xf32>
    %25 = vector.shape_cast %24 : vector<1x1x128xf32> to vector<1x128xf32>
    %26 = vector.broadcast %25 : vector<1x128xf32> to vector<16x128xf32>
    %27 = arith.addf %23, %26 : vector<16x128xf32>
    %cst_21 = arith.constant 0.000000e+00 : f32
    %28 = vector.broadcast %cst_21 : f32 to vector<16x128xf32>
    %29 = arith.maximumf %27, %28 : vector<16x128xf32>
    %30 = arith.truncf %29 : vector<16x128xf32> to vector<16x128xbf16>
    %c3 = arith.constant 3 : index
    %c0_22 = arith.constant 0 : index
    %c0_23 = arith.constant 0 : index
    %31 = vector.load %arg2[%c3, %c0_22, %c0_23] : memref<6x128x128xbf16, #tpu.memory_space<vmem>>, vector<1x128x128xbf16>
    %32 = vector.shape_cast %31 : vector<1x128x128xbf16> to vector<128x128xbf16>
    %cst_24 = arith.constant dense<0.000000e+00> : vector<16x128xf32>
    %33 = tpu.matmul %30, %32, %cst_24 {dimension_numbers = #tpu.dot_dimension_numbers<[1], [0], [0], [1], [0, 0, 1, 1], [], []>} : vector<16x128xbf16>, vector<128x128xbf16>, vector<16x128xf32> -> vector<16x128xf32>
    %c3_25 = arith.constant 3 : index
    %c0_26 = arith.constant 0 : index
    %c0_27 = arith.constant 0 : index
    %34 = vector.load %arg3[%c3_25, %c0_26, %c0_27] : memref<6x1x128xf32, #tpu.memory_space<vmem>>, vector<1x1x128xf32>
    %35 = vector.shape_cast %34 : vector<1x1x128xf32> to vector<1x128xf32>
    %36 = vector.broadcast %35 : vector<1x128xf32> to vector<16x128xf32>
    %37 = arith.addf %33, %36 : vector<16x128xf32>
    %cst_28 = arith.constant 0.000000e+00 : f32
    %38 = vector.broadcast %cst_28 : f32 to vector<16x128xf32>
    %39 = arith.maximumf %37, %38 : vector<16x128xf32>
    %40 = arith.truncf %39 : vector<16x128xf32> to vector<16x128xbf16>
    %c4 = arith.constant 4 : index
    %c0_29 = arith.constant 0 : index
    %c0_30 = arith.constant 0 : index
    %41 = vector.load %arg2[%c4, %c0_29, %c0_30] : memref<6x128x128xbf16, #tpu.memory_space<vmem>>, vector<1x128x128xbf16>
    %42 = vector.shape_cast %41 : vector<1x128x128xbf16> to vector<128x128xbf16>
    %cst_31 = arith.constant dense<0.000000e+00> : vector<16x128xf32>
    %43 = tpu.matmul %40, %42, %cst_31 {dimension_numbers = #tpu.dot_dimension_numbers<[1], [0], [0], [1], [0, 0, 1, 1], [], []>} : vector<16x128xbf16>, vector<128x128xbf16>, vector<16x128xf32> -> vector<16x128xf32>
    %c4_32 = arith.constant 4 : index
    %c0_33 = arith.constant 0 : index
    %c0_34 = arith.constant 0 : index
    %44 = vector.load %arg3[%c4_32, %c0_33, %c0_34] : memref<6x1x128xf32, #tpu.memory_space<vmem>>, vector<1x1x128xf32>
    %45 = vector.shape_cast %44 : vector<1x1x128xf32> to vector<1x128xf32>
    %46 = vector.broadcast %45 : vector<1x128xf32> to vector<16x128xf32>
    %47 = arith.addf %43, %46 : vector<16x128xf32>
    %cst_35 = arith.constant 0.000000e+00 : f32
    %48 = vector.broadcast %cst_35 : f32 to vector<16x128xf32>
    %49 = arith.maximumf %47, %48 : vector<16x128xf32>
    %50 = arith.truncf %49 : vector<16x128xf32> to vector<16x128xbf16>
    %c5 = arith.constant 5 : index
    %c0_36 = arith.constant 0 : index
    %c0_37 = arith.constant 0 : index
    %51 = vector.load %arg2[%c5, %c0_36, %c0_37] : memref<6x128x128xbf16, #tpu.memory_space<vmem>>, vector<1x16x128xbf16>
    %52 = vector.shape_cast %51 : vector<1x16x128xbf16> to vector<16x128xbf16>
    %cst_38 = arith.constant dense<0.000000e+00> : vector<16x16xf32>
    %53 = tpu.matmul %52, %50, %cst_38 {dimension_numbers = #tpu.dot_dimension_numbers<[1], [1], [0], [0], [0, 0, 1, 0], [], []>} : vector<16x128xbf16>, vector<16x128xbf16>, vector<16x16xf32> -> vector<16x16xf32>
    %c5_39 = arith.constant 5 : index
    %c0_40 = arith.constant 0 : index
    %c0_41 = arith.constant 0 : index
    %54 = vector.load %arg3[%c5_39, %c0_40, %c0_41] : memref<6x1x128xf32, #tpu.memory_space<vmem>>, vector<1x1x128xf32>
    %55 = vector.shape_cast %54 : vector<1x1x128xf32> to vector<1x128xf32>
    %56 = vector.extract_strided_slice %53 {offsets = [0, 0], sizes = [1, 16], strides = [1, 1]} : vector<16x16xf32> to vector<1x16xf32>
    %57 = vector.extract_strided_slice %55 {offsets = [0, 0], sizes = [1, 1], strides = [1, 1]} : vector<1x128xf32> to vector<1x1xf32>
    %58 = vector.broadcast %57 : vector<1x1xf32> to vector<1x16xf32>
    %59 = arith.addf %56, %58 : vector<1x16xf32>
    %c0_42 = arith.constant 0 : index
    %c0_43 = arith.constant 0 : index
    %c0_44 = arith.constant 0 : index
    %60 = vector.load %arg4[%c0_42, %c0_43, %c0_44] : memref<1x1x16xf32, #tpu.memory_space<vmem>>, vector<1x1x16xf32>
    %61 = vector.shape_cast %60 : vector<1x1x16xf32> to vector<1x16xf32>
    %62 = vector.shape_cast %59 : vector<1x16xf32> to vector<1x1x16xf32>
    tpu.vector_store %arg4[%c0_42, %c0_43, %c0_44], %62 {strides = array<i32>} : memref<1x1x16xf32, #tpu.memory_space<vmem>>, vector<1x1x16xf32>,
    return
  }
  func.func @transform_0(%arg0: i32) -> (i32, i32) {
    %c0_i32 = arith.constant 0 : i32
    %c0_i32_0 = arith.constant 0 : i32
    return %arg0, %c0_i32 : i32, i32
  }
  func.func @transform_1(%arg0: i32) -> (i32, i32, i32) {
    %c0_i32 = arith.constant 0 : i32
    %c0_i32_0 = arith.constant 0 : i32
    %c0_i32_1 = arith.constant 0 : i32
    %c0_i32_2 = arith.constant 0 : i32
    return %c0_i32, %c0_i32_0, %c0_i32_1 : i32, i32, i32
  }
  func.func @transform_2(%arg0: i32) -> (i32, i32, i32) {
    %c0_i32 = arith.constant 0 : i32
    %c0_i32_0 = arith.constant 0 : i32
    %c0_i32_1 = arith.constant 0 : i32
    %c0_i32_2 = arith.constant 0 : i32
    return %c0_i32, %c0_i32_0, %c0_i32_1 : i32, i32, i32
  }
  func.func @transform_3(%arg0: i32) -> (i32, i32, i32) {
    %c0_i32 = arith.constant 0 : i32
    %c0_i32_0 = arith.constant 0 : i32
    %c0_i32_1 = arith.constant 0 : i32
    return %arg0, %c0_i32, %c0_i32_0 : i32, i32, i32
  }
}

</mosaic_0001>

<llo_original>
// kernel: qv1_forward.1
$region0: #{qv1_forward.1}
  #allocation0 [shape = 'u32[]', space=smem, size = 0x4, offset = 0x4, fixed_abs, tag = 'smem constant byte address 0x4 - core index']
  #allocation1 [shape = 'u32[144,128]{1,0:T(1,128)}', space=vmem, size = 0x12000, scoped, tag = 'internal scratch']
  %s0 = inlined_call_operand.vmem [shape: bf16[32,16], index: 0, kind: input, shape index: {}]
  %s1 = inlined_call_operand.hbm [shape: bf16[6,128,128], index: 1, kind: input, shape index: {}]
  %s2 = inlined_call_operand.vmem [shape: f32[6,1,128], index: 2, kind: input, shape index: {}]
  %s3 = inlined_call_operand.vmem [shape: f32[2,1,16], index: 3, kind: output, shape index: {}]
  %s4 = sld [smem:[#allocation0]]
  $region49: #{qv1_forward.1} parent=0
    _
  %s6 = ssub.s32 1, %s4
  %s7 = scalar_select 0, %s6, %s4
  $region1: #{qv1_forward.1} parent=0
    #allocation2 [shape = 'u8[196608]{0}', space=vmem, size = 0x30000, scoped, tag = 'input window, operand 1, single buffered']
    #allocation3 [shape = 's32[2]{0}', space=sflag, size = 0x8, scoped, tag = 'scoped memory for qv1_forward.1']
    %8 = vsyncpa [#allocation3], 0
    loop: start=0, step=1, limit=4
    $region2: #{qv1_forward.1} parent=1 // loop_pre_header
      _
    $region3: #{qv1_forward.1} parent=1 // loop_header
      %s10 = sphi 0, %s14
      %p11 = scmp.ge.s32.totalorder %s10, 4
      %s20 = sphi 0, %s22
      %s23 = sphi 0, %s20
      %s24 = sphi 0, %s23
      %s40 = sphi 0, %s24
      %s44 = sphi 0, %s44
      %s46 = sphi 0, %s44
      %s47 = sphi 0, %s46
      %s61 = sphi 0, %s47
      %s65 = sphi 0, %s65
      %s67 = sphi 0, %s65
      %s68 = sphi 0, %s67
      %s82 = sphi 0, %s68
      %s88 = sphi 0, %s90
      %s91 = sphi 0, %s88
      %s92 = sphi 0, %s91
      %s108 = sphi 0, %s92
    $region4: #{qv1_forward.1} parent=1 // loop_header_branch
      %13 = sbr.rel (%p11) target = $region8
    $region5: #{qv1_forward.1} parent=1 // loop_body
      %s15 = ssub.s32 %s10, 1
      %s16 = ssub.s32 %s10, 2
      %s17 = sadd.s32 %s10, 1
      %s18 = ssub.s32 %s10, %s17
      %p19 = scmp.eq.s32.totalorder %s18, 0
      %s21 = sadd.s32 %s20, 1
      %s22 = scalar_select %p19, %s20, %s21
      %p25 = pneg %p19
      %p26 = scmp.eq.s32.totalorder %s10, 1
      %p27 = por %p25, %p26
      %p28 = scmp.ne.s32.totalorder %s20, %s23
      %p29 = scmp.eq.s32.totalorder %s10, 0
      %p30 = por %p28, %p29
      %p31 = scmp.ne.s32.totalorder %s20, %s23
      %p32 = scmp.eq.s32.totalorder %s15, 1
      %p33 = por %p31, %p32
      %p34 = scmp.ne.s32.totalorder %s23, %s24
      %p35 = scmp.eq.s32.totalorder %s15, 0
      %p36 = por %p34, %p35
      %p37 = scmp.ne.s32.totalorder %s23, %s24
      %p38 = scmp.eq.s32.totalorder %s16, 1
      %p39 = por %p37, %p38
      %p41 = scmp.ne.s32.totalorder %s24, %s40
      %p42 = scmp.eq.s32.totalorder %s16, 0
      %p43 = por %p41, %p42
      %s45 = sadd.s32 %s44, 1
      %p48 = scmp.eq.s32.totalorder %s10, 1
      %p49 = scmp.ne.s32.totalorder %s44, %s46
      %p50 = scmp.eq.s32.totalorder %s10, 0
      %p51 = por %p49, %p50
      %p52 = scmp.ne.s32.totalorder %s44, %s46
      %p53 = scmp.eq.s32.totalorder %s15, 1
      %p54 = por %p52, %p53
      %p55 = scmp.ne.s32.totalorder %s46, %s47
      %p56 = scmp.eq.s32.totalorder %s15, 0
      %p57 = por %p55, %p56
      %p58 = scmp.ne.s32.totalorder %s46, %s47
      %p59 = scmp.eq.s32.totalorder %s16, 1
      %p60 = por %p58, %p59
      %p62 = scmp.ne.s32.totalorder %s47, %s61
      %p63 = scmp.eq.s32.totalorder %s16, 0
      %p64 = por %p62, %p63
      %s66 = sadd.s32 %s65, 1
      %p69 = scmp.eq.s32.totalorder %s10, 1
      %p70 = scmp.ne.s32.totalorder %s65, %s67
      %p71 = scmp.eq.s32.totalorder %s10, 0
      %p72 = por %p70, %p71
      %p73 = scmp.ne.s32.totalorder %s65, %s67
      %p74 = scmp.eq.s32.totalorder %s15, 1
      %p75 = por %p73, %p74
      %p76 = scmp.ne.s32.totalorder %s67, %s68
      %p77 = scmp.eq.s32.totalorder %s15, 0
      %p78 = por %p76, %p77
      %p79 = scmp.ne.s32.totalorder %s67, %s68
      %p80 = scmp.eq.s32.totalorder %s16, 1
      %p81 = por %p79, %p80
      %p83 = scmp.ne.s32.totalorder %s68, %s82
      %p84 = scmp.eq.s32.totalorder %s16, 0
      %p85 = por %p83, %p84
      %s86 = ssub.s32 %s10, %s17
      %p87 = scmp.eq.s32.totalorder %s86, 0
      %s89 = sadd.s32 %s88, 1
      %s90 = scalar_select %p87, %s88, %s89
      %p93 = pneg %p87
      %p94 = scmp.eq.s32.totalorder %s10, 1
      %p95 = por %p93, %p94
      %p96 = scmp.ne.s32.totalorder %s88, %s91
      %p97 = scmp.eq.s32.totalorder %s10, 0
      %p98 = por %p96, %p97
      %p99 = scmp.ne.s32.totalorder %s88, %s91
      %p100 = scmp.eq.s32.totalorder %s15, 1
      %p101 = por %p99, %p100
      %p102 = scmp.ne.s32.totalorder %s91, %s92
      %p103 = scmp.eq.s32.totalorder %s15, 0
      %p104 = por %p102, %p103
      %p105 = scmp.ne.s32.totalorder %s91, %s92
      %p106 = scmp.eq.s32.totalorder %s16, 1
      %p107 = por %p105, %p106
      %p109 = scmp.ne.s32.totalorder %s92, %s108
      %p110 = scmp.eq.s32.totalorder %s16, 0
      %p111 = por %p109, %p110
      %p112 = scmp.le.s32.totalorder 1, %s10
      %p113 = scmp.lt.s32.totalorder %s10, 3
      %p114 = pnand %p112, %p113
      %p115 = pneg %p114
      // Predicated region
      $region9: #{qv1_forward.1} parent=5 // pred_check
        _
      $region10: #{qv1_forward.1} parent=5 // pred_check_branch
        %117 = sbr.rel (%p114) target = $region12
      $region11: #{qv1_forward.1} parent=5 // pred_region
        %s118 = ssub.s32 %s10, 1
        // Predicated region
        $region13: #{qv1_forward.1} parent=11 // pred_check
          %p119 = pneg %p57
        $region14: #{qv1_forward.1} parent=11 // pred_check_branch
          %121 = sbr.rel (%p119) target = $region16
        $region15: #{qv1_forward.1} parent=11 // pred_region
          %s123 = ssub.s32 6144, 6144
          %124 = vsyncadd [#allocation3], %s123
          %s125 = sshll.u32 [#allocation2], 4
          %s126 = int_to_ptr.vmem [resolvable:$true] %s125
          %131 = dma.hbm_to_vmem [thread:$0]  %s1, 6144, %s126, [#allocation3], 64, 64, 4
        $region16: #{qv1_forward.1} parent=11 // pred_fallthru
          _
        // Predicated region
        $region17: #{qv1_forward.1} parent=11 // pred_check
          %p132 = pneg %p78
        $region18: #{qv1_forward.1} parent=11 // pred_check_branch
          %134 = sbr.rel (%p132) target = $region20
        $region19: #{qv1_forward.1} parent=11 // pred_region
          _
        $region20: #{qv1_forward.1} parent=11 // pred_fallthru
          _
      $region12: #{qv1_forward.1} parent=5 // pred_fallthru
        _
      %p135 = scmp.lt.s32.totalorder %s10, 2
      // Predicated region
      $region21: #{qv1_forward.1} parent=5 // pred_check
        %p136 = pneg %p135
      $region22: #{qv1_forward.1} parent=5 // pred_check_branch
        %138 = sbr.rel (%p136) target = $region24
      $region23: #{qv1_forward.1} parent=5 // pred_region
        // Predicated region
        $region25: #{qv1_forward.1} parent=23 // pred_check
          %p139 = pneg %p30
        $region26: #{qv1_forward.1} parent=23 // pred_check_branch
          %141 = sbr.rel (%p139) target = $region28
        $region27: #{qv1_forward.1} parent=23 // pred_region
          %s142 = smul.u32 2, %s10
          %p143 = scmp.lt.s32.totalorder %s142, 3
          %s144 = scalar_select %p143, %s142, 3
          %s145 = smul.addr %s144, 4
          %s146 = scalar_lea.vmem %s0, %s145
          %s147 = smul.u32 2, %s10
        $region28: #{qv1_forward.1} parent=23 // pred_fallthru
          _
      $region24: #{qv1_forward.1} parent=5 // pred_fallthru
        _
      %p148 = scmp.le.s32.totalorder 1, %s10
      %p149 = scmp.lt.s32.totalorder %s10, 3
      %p150 = pnand %p148, %p149
      %p151 = pneg %p150
      // Predicated region
      $region29: #{qv1_forward.1} parent=5 // pred_check
        _
      $region30: #{qv1_forward.1} parent=5 // pred_check_branch
        %153 = sbr.rel (%p150) target = $region32
      $region31: #{qv1_forward.1} parent=5 // pred_region
        %s154 = ssub.s32 %s10, 1
        // Predicated region
        $region33: #{qv1_forward.1} parent=31 // pred_check
          %p155 = pneg %p57
        $region34: #{qv1_forward.1} parent=31 // pred_check_branch
          %157 = sbr.rel (%p155) target = $region36
        $region35: #{qv1_forward.1} parent=31 // pred_region
          %158 = dma.done [#allocation3], 6144
        $region36: #{qv1_forward.1} parent=31 // pred_fallthru
          _
        %s159 = smul.u32 2, %s15
        %p160 = scmp.lt.s32.totalorder %s159, 3
        %s161 = scalar_select %p160, %s159, 3
        %s162 = smul.addr %s161, 4
        %s163 = scalar_lea.vmem %s0, %s162
        %p164 = pneg %p36
        %p165 = pneg %p33
        %p166 = pneg %p57
        %p167 = pneg %p54
        %p168 = pneg %p78
        %p169 = pneg %p75
        %p170 = pneg %p104
        %p171 = pneg %p101
        %p172 = scmp.lt.s32.totalorder %s15, 1
        %s173 = scalar_select %p172, %s15, 1
        %s174 = scalar_lea.vmem %s3, %s173
        %s175 = smul.u32 2, %s15
        %p176 = scmp.lt.s32.totalorder %s175, 3
        %s177 = scalar_select %p176, %s175, 3
        %s178 = smul.addr %s177, 4
        %s179 = scalar_lea.vmem %s0, %s178
        %s180 = smul.u32 2, %s15
        %p181 = scmp.lt.s32.totalorder %s15, 1
        %s182 = scalar_select %p181, %s15, 1
        %s183 = scalar_lea.vmem %s3, %s182
        %v185 = vld [vmem:[#allocation2] sm:$0xf]
        %v186 = vld [vmem:[#allocation2 + $0x4] sm:$0xf]
        %v187 = vld [vmem:[%s179] sm:$0xf]
        %v188 = vld [vmem:[%s179 + $0x4] sm:$0xf]
        %v189 = vld [vmem:[%s2] sm:$0x1]
        %v191 = vlaneseq
        %v192 = vshrl.u32 %v191, 7
        %v193 = vsub.s32 0, %v192
        %v194 = vrot.slane %v189, %v193
        %v198 = vunpack.c.l.b16 %v187
        %v199 = vunpack.c.l.b16 %v188
        %v200 = vpack.c.b16 %v199, %v198
        %v203 = vunpack.c.l.b16 %v185
        %v204 = vunpack.c.l.b16 %v186
        %v205 = vpack.c.b16 %v204, %v203
        %vm207 = vcmask 130048
        %v209 = vsel %vm207, %v200, 0
        %211 = vmatprep.subr.bf16.mxu0 0
        %212 = vmatpush1.bf16.msra.mxu0 %v205
        %213 = vmatprep.subr.bf16.mxu0 0
        %214 = vmatpush1.bf16.msra.mxu0 0
        %215 = vmatprep.subr.bf16.mxu0 0
        %216 = vmatpush1.bf16.msra.mxu0 0
        %217 = vmatprep.subr.bf16.mxu0 0
        %218 = vmatpush1.bf16.msra.mxu0 0
        %219 = vmatprep.subr.bf16.mxu0 0
        %220 = vmatpush1.bf16.msra.mxu0 0
        %221 = vmatprep.subr.bf16.mxu0 0
        %222 = vmatpush1.bf16.msra.mxu0 0
        %223 = vmatprep.subr.bf16.mxu0 0
        %224 = vmatpush1.bf16.msra.mxu0 0
        %225 = vmatprep.subr.bf16.mxu0 0
        %226 = vmatpush1.bf16.msra.mxu0 0
        %227 = vmatprep.subr.bf16.mxu0 0
        %228 = vmatpush1.bf16.msra.mxu0 0
        %229 = vmatprep.subr.bf16.mxu0 0
        %230 = vmatpush1.bf16.msra.mxu0 0
        %231 = vmatprep.subr.bf16.mxu0 0
        %232 = vmatpush1.bf16.msra.mxu0 0
        %233 = vmatprep.subr.bf16.mxu0 0
        %234 = vmatpush1.bf16.msra.mxu0 0
        %235 = vmatprep.subr.bf16.mxu0 0
        %236 = vmatpush1.bf16.msra.mxu0 0
        %237 = vmatprep.subr.bf16.mxu0 0
        %238 = vmatpush1.bf16.msra.mxu0 0
        %239 = vmatprep.subr.bf16.mxu0 0
        %240 = vmatpush1.bf16.msra.mxu0 0
        %241 = vmatprep.subr.bf16.mxu0 0
        %242 = vmatpush1.bf16.msra.mxu0 0
        %243 = vmatprep.mubr.bf16.mxu0 0
        %244 = vmatmul.mubr.bf16.gmra.mrb[0].mxu0 %v209
        %v245 = vpop.f32.mrb[0].mxu0
        %v246 = vadd.f32 %v194, %v245
        %v247 = vpop.f32.mrb[0].mxu0
        %v248 = vpop.f32.mrb[0].mxu0
        %v249 = vadd.f32 %v194, %v248
        %v250 = vpop.f32.mrb[0].mxu0
        %251 = vdwg.mxu0
        %v252 = vmax.f32 %v246, 0.0
        %v253 = vmax.f32 %v249, 0.0
        %v254 = vpack.c.bf16 %v253, %v252
        %s255 = scalar_lea.vmem [#allocation2], 64
        %v256 = vld [vmem:[%s255] sm:$0xf]
        %v257 = vld [vmem:[%s255 + $0x4] sm:$0xf]
        %v258 = vld [vmem:[%s255 + $0x8] sm:$0xf]
        %v259 = vld [vmem:[%s255 + $0xc] sm:$0xf]
        %v260 = vld [vmem:[%s255 + $0x10] sm:$0xf]
        %v261 = vld [vmem:[%s255 + $0x14] sm:$0xf]
        %v262 = vld [vmem:[%s255 + $0x18] sm:$0xf]
        %v263 = vld [vmem:[%s255 + $0x1c] sm:$0xf]
        %v264 = vld [vmem:[%s255 + $0x20] sm:$0xf]
        %v265 = vld [vmem:[%s255 + $0x24] sm:$0xf]
        %v266 = vld [vmem:[%s255 + $0x28] sm:$0xf]
        %v267 = vld [vmem:[%s255 + $0x2c] sm:$0xf]
        %v268 = vld [vmem:[%s255 + $0x30] sm:$0xf]
        %v269 = vld [vmem:[%s255 + $0x34] sm:$0xf]
        %v270 = vld [vmem:[%s255 + $0x38] sm:$0xf]
        %v271 = vld [vmem:[%s255 + $0x3c] sm:$0xf]
        %s272 = scalar_lea.vmem %s2, 1
        %v273 = vld [vmem:[%s272] sm:$0x1]
        %v275 = vlaneseq
        %v276 = vshrl.u32 %v275, 7
        %v277 = vsub.s32 0, %v276
        %v278 = vrot.slane %v273, %v277
        %v296 = vunpack.c.l.b16 %v256
        %v297 = vunpack.c.l.b16 %v257
        %v298 = vunpack.c.l.b16 %v258
        %v299 = vunpack.c.l.b16 %v259
        %v300 = vunpack.c.l.b16 %v260
        %v301 = vunpack.c.l.b16 %v261
        %v302 = vunpack.c.l.b16 %v262
        %v303 = vunpack.c.l.b16 %v263
        %v304 = vunpack.c.l.b16 %v264
        %v305 = vunpack.c.l.b16 %v265
        %v306 = vunpack.c.l.b16 %v266
        %v307 = vunpack.c.l.b16 %v267
        %v308 = vunpack.c.l.b16 %v268
        %v309 = vunpack.c.l.b16 %v269
        %v310 = vunpack.c.l.b16 %v270
        %v311 = vunpack.c.l.b16 %v271
        %v312 = vpack.c.b16 %v297, %v296
        %v313 = vpack.c.b16 %v299, %v298
        %v314 = vpack.c.b16 %v301, %v300
        %v315 = vpack.c.b16 %v303, %v302
        %v316 = vpack.c.b16 %v305, %v304
        %v317 = vpack.c.b16 %v307, %v306
        %v318 = vpack.c.b16 %v309, %v308
        %v319 = vpack.c.b16 %v311, %v310
        %328 = vmatprep.subr.bf16.mxu0 0
        %329 = vmatpush1.bf16.msra.mxu0 %v312
        %330 = vmatprep.subr.bf16.mxu0 0
        %331 = vmatpush1.bf16.msra.mxu0 %v313
        %332 = vmatprep.subr.bf16.mxu0 0
        %333 = vmatpush1.bf16.msra.mxu0 %v314
        %334 = vmatprep.subr.bf16.mxu0 0
        %335 = vmatpush1.bf16.msra.mxu0 %v315
        %336 = vmatprep.subr.bf16.mxu0 0
        %337 = vmatpush1.bf16.msra.mxu0 %v316
        %338 = vmatprep.subr.bf16.mxu0 0
        %339 = vmatpush1.bf16.msra.mxu0 %v317
        %340 = vmatprep.subr.bf16.mxu0 0
        %341 = vmatpush1.bf16.msra.mxu0 %v318
        %342 = vmatprep.subr.bf16.mxu0 0
        %343 = vmatpush1.bf16.msra.mxu0 %v319
        %344 = vmatprep.subr.bf16.mxu0 0
        %345 = vmatpush1.bf16.msra.mxu0 0
        %346 = vmatprep.subr.bf16.mxu0 0
        %347 = vmatpush1.bf16.msra.mxu0 0
        %348 = vmatprep.subr.bf16.mxu0 0
        %349 = vmatpush1.bf16.msra.mxu0 0
        %350 = vmatprep.subr.bf16.mxu0 0
        %351 = vmatpush1.bf16.msra.mxu0 0
        %352 = vmatprep.subr.bf16.mxu0 0
        %353 = vmatpush1.bf16.msra.mxu0 0
        %354 = vmatprep.subr.bf16.mxu0 0
        %355 = vmatpush1.bf16.msra.mxu0 0
        %356 = vmatprep.subr.bf16.mxu0 0
        %357 = vmatpush1.bf16.msra.mxu0 0
        %358 = vmatprep.subr.bf16.mxu0 0
        %359 = vmatpush1.bf16.msra.mxu0 0
        %360 = vmatprep.mubr.bf16.mxu0 0
        %361 = vmatmul.mubr.bf16.gmra.mrb[0].mxu0 %v254
        %v362 = vpop.f32.mrb[0].mxu0
        %v363 = vadd.f32 %v278, %v362
        %v364 = vpop.f32.mrb[0].mxu0
        %v365 = vpop.f32.mrb[0].mxu0
        %v366 = vadd.f32 %v278, %v365
        %v367 = vpop.f32.mrb[0].mxu0
        %368 = vdwg.mxu0
        %v369 = vmax.f32 %v363, 0.0
        %v370 = vmax.f32 %v366, 0.0
        %v371 = vpack.c.bf16 %v370, %v369
        %s372 = scalar_lea.vmem [#allocation2], 128
        %v373 = vld [vmem:[%s372] sm:$0xf]
        %v374 = vld [vmem:[%s372 + $0x4] sm:$0xf]
        %v375 = vld [vmem:[%s372 + $0x8] sm:$0xf]
        %v376 = vld [vmem:[%s372 + $0xc] sm:$0xf]
        %v377 = vld [vmem:[%s372 + $0x10] sm:$0xf]
        %v378 = vld [vmem:[%s372 + $0x14] sm:$0xf]
        %v379 = vld [vmem:[%s372 + $0x18] sm:$0xf]
        %v380 = vld [vmem:[%s372 + $0x1c] sm:$0xf]
        %v381 = vld [vmem:[%s372 + $0x20] sm:$0xf]
        %v382 = vld [vmem:[%s372 + $0x24] sm:$0xf]
        %v383 = vld [vmem:[%s372 + $0x28] sm:$0xf]
        %v384 = vld [vmem:[%s372 + $0x2c] sm:$0xf]
        %v385 = vld [vmem:[%s372 + $0x30] sm:$0xf]
        %v386 = vld [vmem:[%s372 + $0x34] sm:$0xf]
        %v387 = vld [vmem:[%s372 + $0x38] sm:$0xf]
        %v388 = vld [vmem:[%s372 + $0x3c] sm:$0xf]
        %s389 = scalar_lea.vmem %s2, 2
        %v390 = vld [vmem:[%s389] sm:$0x1]
        %v392 = vlaneseq
        %v393 = vshrl.u32 %v392, 7
        %v394 = vsub.s32 0, %v393
        %v395 = vrot.slane %v390, %v394
        %v413 = vunpack.c.l.b16 %v373
        %v414 = vunpack.c.l.b16 %v374
        %v415 = vunpack.c.l.b16 %v375
        %v416 = vunpack.c.l.b16 %v376
        %v417 = vunpack.c.l.b16 %v377
        %v418 = vunpack.c.l.b16 %v378
        %v419 = vunpack.c.l.b16 %v379
        %v420 = vunpack.c.l.b16 %v380
        %v421 = vunpack.c.l.b16 %v381
        %v422 = vunpack.c.l.b16 %v382
        %v423 = vunpack.c.l.b16 %v383
        %v424 = vunpack.c.l.b16 %v384
        %v425 = vunpack.c.l.b16 %v385
        %v426 = vunpack.c.l.b16 %v386
        %v427 = vunpack.c.l.b16 %v387
        %v428 = vunpack.c.l.b16 %v388
        %v429 = vpack.c.b16 %v414, %v413
        %v430 = vpack.c.b16 %v416, %v415
        %v431 = vpack.c.b16 %v418, %v417
        %v432 = vpack.c.b16 %v420, %v419
        %v433 = vpack.c.b16 %v422, %v421
        %v434 = vpack.c.b16 %v424, %v423
        %v435 = vpack.c.b16 %v426, %v425
        %v436 = vpack.c.b16 %v428, %v427
        %445 = vmatprep.subr.bf16.mxu0 0
        %446 = vmatpush1.bf16.msra.mxu0 %v429
        %447 = vmatprep.subr.bf16.mxu0 0
        %448 = vmatpush1.bf16.msra.mxu0 %v430
        %449 = vmatprep.subr.bf16.mxu0 0
        %450 = vmatpush1.bf16.msra.mxu0 %v431
        %451 = vmatprep.subr.bf16.mxu0 0
        %452 = vmatpush1.bf16.msra.mxu0 %v432
        %453 = vmatprep.subr.bf16.mxu0 0
        %454 = vmatpush1.bf16.msra.mxu0 %v433
        %455 = vmatprep.subr.bf16.mxu0 0
        %456 = vmatpush1.bf16.msra.mxu0 %v434
        %457 = vmatprep.subr.bf16.mxu0 0
        %458 = vmatpush1.bf16.msra.mxu0 %v435
        %459 = vmatprep.subr.bf16.mxu0 0
        %460 = vmatpush1.bf16.msra.mxu0 %v436
        %461 = vmatprep.subr.bf16.mxu0 0
        %462 = vmatpush1.bf16.msra.mxu0 0
        %463 = vmatprep.subr.bf16.mxu0 0
        %464 = vmatpush1.bf16.msra.mxu0 0
        %465 = vmatprep.subr.bf16.mxu0 0
        %466 = vmatpush1.bf16.msra.mxu0 0
        %467 = vmatprep.subr.bf16.mxu0 0
        %468 = vmatpush1.bf16.msra.mxu0 0
        %469 = vmatprep.subr.bf16.mxu0 0
        %470 = vmatpush1.bf16.msra.mxu0 0
        %471 = vmatprep.subr.bf16.mxu0 0
        %472 = vmatpush1.bf16.msra.mxu0 0
        %473 = vmatprep.subr.bf16.mxu0 0
        %474 = vmatpush1.bf16.msra.mxu0 0
        %475 = vmatprep.subr.bf16.mxu0 0
        %476 = vmatpush1.bf16.msra.mxu0 0
        %477 = vmatprep.mubr.bf16.mxu0 0
        %478 = vmatmul.mubr.bf16.gmra.mrb[0].mxu0 %v371
        %v479 = vpop.f32.mrb[0].mxu0
        %v480 = vadd.f32 %v395, %v479
        %v481 = vpop.f32.mrb[0].mxu0
        %v482 = vpop.f32.mrb[0].mxu0
        %v483 = vadd.f32 %v395, %v482
        %v484 = vpop.f32.mrb[0].mxu0
        %485 = vdwg.mxu0
        %v486 = vmax.f32 %v480, 0.0
        %v487 = vmax.f32 %v483, 0.0
        %v488 = vpack.c.bf16 %v487, %v486
        %s489 = scalar_lea.vmem [#allocation2], 192
        %v490 = vld [vmem:[%s489] sm:$0xf]
        %v491 = vld [vmem:[%s489 + $0x4] sm:$0xf]
        %v492 = vld [vmem:[%s489 + $0x8] sm:$0xf]
        %v493 = vld [vmem:[%s489 + $0xc] sm:$0xf]
        %v494 = vld [vmem:[%s489 + $0x10] sm:$0xf]
        %v495 = vld [vmem:[%s489 + $0x14] sm:$0xf]
        %v496 = vld [vmem:[%s489 + $0x18] sm:$0xf]
        %v497 = vld [vmem:[%s489 + $0x1c] sm:$0xf]
        %v498 = vld [vmem:[%s489 + $0x20] sm:$0xf]
        %v499 = vld [vmem:[%s489 + $0x24] sm:$0xf]
        %v500 = vld [vmem:[%s489 + $0x28] sm:$0xf]
        %v501 = vld [vmem:[%s489 + $0x2c] sm:$0xf]
        %v502 = vld [vmem:[%s489 + $0x30] sm:$0xf]
        %v503 = vld [vmem:[%s489 + $0x34] sm:$0xf]
        %v504 = vld [vmem:[%s489 + $0x38] sm:$0xf]
        %v505 = vld [vmem:[%s489 + $0x3c] sm:$0xf]
        %s506 = scalar_lea.vmem %s2, 3
        %v507 = vld [vmem:[%s506] sm:$0x1]
        %v509 = vlaneseq
        %v510 = vshrl.u32 %v509, 7
        %v511 = vsub.s32 0, %v510
        %v512 = vrot.slane %v507, %v511
        %v530 = vunpack.c.l.b16 %v490
        %v531 = vunpack.c.l.b16 %v491
        %v532 = vunpack.c.l.b16 %v492
        %v533 = vunpack.c.l.b16 %v493
        %v534 = vunpack.c.l.b16 %v494
        %v535 = vunpack.c.l.b16 %v495
        %v536 = vunpack.c.l.b16 %v496
        %v537 = vunpack.c.l.b16 %v497
        %v538 = vunpack.c.l.b16 %v498
        %v539 = vunpack.c.l.b16 %v499
        %v540 = vunpack.c.l.b16 %v500
        %v541 = vunpack.c.l.b16 %v501
        %v542 = vunpack.c.l.b16 %v502
        %v543 = vunpack.c.l.b16 %v503
        %v544 = vunpack.c.l.b16 %v504
        %v545 = vunpack.c.l.b16 %v505
        %v546 = vpack.c.b16 %v531, %v530
        %v547 = vpack.c.b16 %v533, %v532
        %v548 = vpack.c.b16 %v535, %v534
        %v549 = vpack.c.b16 %v537, %v536
        %v550 = vpack.c.b16 %v539, %v538
        %v551 = vpack.c.b16 %v541, %v540
        %v552 = vpack.c.b16 %v543, %v542
        %v553 = vpack.c.b16 %v545, %v544
        %562 = vmatprep.subr.bf16.mxu0 0
        %563 = vmatpush1.bf16.msra.mxu0 %v546
        %564 = vmatprep.subr.bf16.mxu0 0
        %565 = vmatpush1.bf16.msra.mxu0 %v547
        %566 = vmatprep.subr.bf16.mxu0 0
        %567 = vmatpush1.bf16.msra.mxu0 %v548
        %568 = vmatprep.subr.bf16.mxu0 0
        %569 = vmatpush1.bf16.msra.mxu0 %v549
        %570 = vmatprep.subr.bf16.mxu0 0
        %571 = vmatpush1.bf16.msra.mxu0 %v550
        %572 = vmatprep.subr.bf16.mxu0 0
        %573 = vmatpush1.bf16.msra.mxu0 %v551
        %574 = vmatprep.subr.bf16.mxu0 0
        %575 = vmatpush1.bf16.msra.mxu0 %v552
        %576 = vmatprep.subr.bf16.mxu0 0
        %577 = vmatpush1.bf16.msra.mxu0 %v553
        %578 = vmatprep.subr.bf16.mxu0 0
        %579 = vmatpush1.bf16.msra.mxu0 0
        %580 = vmatprep.subr.bf16.mxu0 0
        %581 = vmatpush1.bf16.msra.mxu0 0
        %582 = vmatprep.subr.bf16.mxu0 0
        %583 = vmatpush1.bf16.msra.mxu0 0
        %584 = vmatprep.subr.bf16.mxu0 0
        %585 = vmatpush1.bf16.msra.mxu0 0
        %586 = vmatprep.subr.bf16.mxu0 0
        %587 = vmatpush1.bf16.msra.mxu0 0
        %588 = vmatprep.subr.bf16.mxu0 0
        %589 = vmatpush1.bf16.msra.mxu0 0
        %590 = vmatprep.subr.bf16.mxu0 0
        %591 = vmatpush1.bf16.msra.mxu0 0
        %592 = vmatprep.subr.bf16.mxu0 0
        %593 = vmatpush1.bf16.msra.mxu0 0
        %594 = vmatprep.mubr.bf16.mxu0 0
        %595 = vmatmul.mubr.bf16.gmra.mrb[0].mxu0 %v488
        %v596 = vpop.f32.mrb[0].mxu0
        %v597 = vadd.f32 %v512, %v596
        %v598 = vpop.f32.mrb[0].mxu0
        %v599 = vpop.f32.mrb[0].mxu0
        %v600 = vadd.f32 %v512, %v599
        %v601 = vpop.f32.mrb[0].mxu0
        %602 = vdwg.mxu0
        %v603 = vmax.f32 %v597, 0.0
        %v604 = vmax.f32 %v600, 0.0
        %v605 = vpack.c.bf16 %v604, %v603
        %s606 = scalar_lea.vmem [#allocation2], 256
        %v607 = vld [vmem:[%s606] sm:$0xf]
        %v608 = vld [vmem:[%s606 + $0x4] sm:$0xf]
        %v609 = vld [vmem:[%s606 + $0x8] sm:$0xf]
        %v610 = vld [vmem:[%s606 + $0xc] sm:$0xf]
        %v611 = vld [vmem:[%s606 + $0x10] sm:$0xf]
        %v612 = vld [vmem:[%s606 + $0x14] sm:$0xf]
        %v613 = vld [vmem:[%s606 + $0x18] sm:$0xf]
        %v614 = vld [vmem:[%s606 + $0x1c] sm:$0xf]
        %v615 = vld [vmem:[%s606 + $0x20] sm:$0xf]
        %v616 = vld [vmem:[%s606 + $0x24] sm:$0xf]
        %v617 = vld [vmem:[%s606 + $0x28] sm:$0xf]
        %v618 = vld [vmem:[%s606 + $0x2c] sm:$0xf]
        %v619 = vld [vmem:[%s606 + $0x30] sm:$0xf]
        %v620 = vld [vmem:[%s606 + $0x34] sm:$0xf]
        %v621 = vld [vmem:[%s606 + $0x38] sm:$0xf]
        %v622 = vld [vmem:[%s606 + $0x3c] sm:$0xf]
        %s623 = scalar_lea.vmem %s2, 4
        %v624 = vld [vmem:[%s623] sm:$0x1]
        %v626 = vlaneseq
        %v627 = vshrl.u32 %v626, 7
        %v628 = vsub.s32 0, %v627
        %v629 = vrot.slane %v624, %v628
        %v647 = vunpack.c.l.b16 %v607
        %v648 = vunpack.c.l.b16 %v608
        %v649 = vunpack.c.l.b16 %v609
        %v650 = vunpack.c.l.b16 %v610
        %v651 = vunpack.c.l.b16 %v611
        %v652 = vunpack.c.l.b16 %v612
        %v653 = vunpack.c.l.b16 %v613
        %v654 = vunpack.c.l.b16 %v614
        %v655 = vunpack.c.l.b16 %v615
        %v656 = vunpack.c.l.b16 %v616
        %v657 = vunpack.c.l.b16 %v617
        %v658 = vunpack.c.l.b16 %v618
        %v659 = vunpack.c.l.b16 %v619
        %v660 = vunpack.c.l.b16 %v620
        %v661 = vunpack.c.l.b16 %v621
        %v662 = vunpack.c.l.b16 %v622
        %v663 = vpack.c.b16 %v648, %v647
        %v664 = vpack.c.b16 %v650, %v649
        %v665 = vpack.c.b16 %v652, %v651
        %v666 = vpack.c.b16 %v654, %v653
        %v667 = vpack.c.b16 %v656, %v655
        %v668 = vpack.c.b16 %v658, %v657
        %v669 = vpack.c.b16 %v660, %v659
        %v670 = vpack.c.b16 %v662, %v661
        %679 = vmatprep.subr.bf16.mxu0 0
        %680 = vmatpush1.bf16.msra.mxu0 %v663
        %681 = vmatprep.subr.bf16.mxu0 0
        %682 = vmatpush1.bf16.msra.mxu0 %v664
        %683 = vmatprep.subr.bf16.mxu0 0
        %684 = vmatpush1.bf16.msra.mxu0 %v665
        %685 = vmatprep.subr.bf16.mxu0 0
        %686 = vmatpush1.bf16.msra.mxu0 %v666
        %687 = vmatprep.subr.bf16.mxu0 0
        %688 = vmatpush1.bf16.msra.mxu0 %v667
        %689 = vmatprep.subr.bf16.mxu0 0
        %690 = vmatpush1.bf16.msra.mxu0 %v668
        %691 = vmatprep.subr.bf16.mxu0 0
        %692 = vmatpush1.bf16.msra.mxu0 %v669
        %693 = vmatprep.subr.bf16.mxu0 0
        %694 = vmatpush1.bf16.msra.mxu0 %v670
        %695 = vmatprep.subr.bf16.mxu0 0
        %696 = vmatpush1.bf16.msra.mxu0 0
        %697 = vmatprep.subr.bf16.mxu0 0
        %698 = vmatpush1.bf16.msra.mxu0 0
        %699 = vmatprep.subr.bf16.mxu0 0
        %700 = vmatpush1.bf16.msra.mxu0 0
        %701 = vmatprep.subr.bf16.mxu0 0
        %702 = vmatpush1.bf16.msra.mxu0 0
        %703 = vmatprep.subr.bf16.mxu0 0
        %704 = vmatpush1.bf16.msra.mxu0 0
        %705 = vmatprep.subr.bf16.mxu0 0
        %706 = vmatpush1.bf16.msra.mxu0 0
        %707 = vmatprep.subr.bf16.mxu0 0
        %708 = vmatpush1.bf16.msra.mxu0 0
        %709 = vmatprep.subr.bf16.mxu0 0
        %710 = vmatpush1.bf16.msra.mxu0 0
        %711 = vmatprep.mubr.bf16.mxu0 0
        %712 = vmatmul.mubr.bf16.gmra.mrb[0].mxu0 %v605
        %v713 = vpop.f32.mrb[0].mxu0
        %v714 = vadd.f32 %v629, %v713
        %v715 = vpop.f32.mrb[0].mxu0
        %v716 = vpop.f32.mrb[0].mxu0
        %v717 = vadd.f32 %v629, %v716
        %v718 = vpop.f32.mrb[0].mxu0
        %719 = vdwg.mxu0
        %v720 = vmax.f32 %v714, 0.0
        %v721 = vmax.f32 %v717, 0.0
        %v722 = vpack.c.bf16 %v721, %v720
        %s723 = scalar_lea.vmem [#allocation2], 320
        %v724 = vld [vmem:[%s723] sm:$0xf]
        %v725 = vld [vmem:[%s723 + $0x4] sm:$0xf]
        %v728 = vunpack.c.l.b16 %v724
        %v729 = vunpack.c.l.b16 %v725
        %v730 = vpack.c.b16 %v729, %v728
        %732 = vmatprep.subr.bf16.mxu0 0
        %733 = vmatpush1.bf16.xpose.msra.mxu0 %v722
        %734 = vmatprep.subr.bf16.mxu0 0
        %735 = vmatpush1.bf16.xpose.msra.mxu0 0
        %736 = vmatprep.subr.bf16.mxu0 0
        %737 = vmatpush1.bf16.xpose.msra.mxu0 0
        %738 = vmatprep.subr.bf16.mxu0 0
        %739 = vmatpush1.bf16.xpose.msra.mxu0 0
        %740 = vmatprep.subr.bf16.mxu0 0
        %741 = vmatpush1.bf16.xpose.msra.mxu0 0
        %742 = vmatprep.subr.bf16.mxu0 0
        %743 = vmatpush1.bf16.xpose.msra.mxu0 0
        %744 = vmatprep.subr.bf16.mxu0 0
        %745 = vmatpush1.bf16.xpose.msra.mxu0 0
        %746 = vmatprep.subr.bf16.mxu0 0
        %747 = vmatpush1.bf16.xpose.msra.mxu0 0
        %748 = vmatprep.subr.bf16.mxu0 0
        %749 = vmatpush1.bf16.xpose.msra.mxu0 0
        %750 = vmatprep.subr.bf16.mxu0 0
        %751 = vmatpush1.bf16.xpose.msra.mxu0 0
        %752 = vmatprep.subr.bf16.mxu0 0
        %753 = vmatpush1.bf16.xpose.msra.mxu0 0
        %754 = vmatprep.subr.bf16.mxu0 0
        %755 = vmatpush1.bf16.xpose.msra.mxu0 0
        %756 = vmatprep.subr.bf16.mxu0 0
        %757 = vmatpush1.bf16.xpose.msra.mxu0 0
        %758 = vmatprep.subr.bf16.mxu0 0
        %759 = vmatpush1.bf16.xpose.msra.mxu0 0
        %760 = vmatprep.subr.bf16.mxu0 0
        %761 = vmatpush1.bf16.xpose.msra.mxu0 0
        %762 = vmatprep.subr.bf16.mxu0 0
        %763 = vmatpush1.bf16.xpose.msra.mxu0 0
        %764 = vmatprep.mubr.bf16.mxu0 0
        %765 = vmatmul.mubr.bf16.gmra.mrb[0].mxu0 %v730
        %v766 = vpop.f32.mrb[0].mxu0
        %v767 = vadd.f32 0.0, %v766
        %v768 = vpop.f32.mrb[0].mxu0
        %v769 = vpop.f32.mrb[0].mxu0
        %v770 = vpop.f32.mrb[0].mxu0
        %771 = vdwg.mxu0
        %s772 = scalar_lea.vmem %s2, 5
        %v773 = vld [vmem:[%s772] sm:$0x1]
        %775 = vset.pattern.permute.xlu0 0
        %776 = vperm.xlu0 %775, %v773
        %v777 = vpop.permute.xlu0 %776
        %v779 = vlaneseq
        %v780 = vshrl.u32 %v779, 7
        %v781 = vsub.s32 0, %v780
        %v782 = vrot.slane %v777, %v781
        %v783 = vadd.f32 %v767, %v782
        %vm784 = vcmask 122880
        %785 = vst.msk [vmem:[%s183] sm:$0x1] %vm784, %v783
        %p786 = scmp.lt.s32.totalorder %s15, 1
        %s787 = scalar_select %p786, %s15, 1
        %s788 = scalar_lea.vmem %s3, %s787
        // Predicated region
        $region37: #{qv1_forward.1} parent=31 // pred_check
          %p789 = pneg %p101
        $region38: #{qv1_forward.1} parent=31 // pred_check_branch
          %791 = sbr.rel (%p789) target = $region40
        $region39: #{qv1_forward.1} parent=31 // pred_region
          _
        $region40: #{qv1_forward.1} parent=31 // pred_fallthru
          _
      $region32: #{qv1_forward.1} parent=5 // pred_fallthru
        _
      %p792 = scmp.le.s32.totalorder 2, %s10
      // Predicated region
      $region41: #{qv1_forward.1} parent=5 // pred_check
        %p793 = pneg %p792
      $region42: #{qv1_forward.1} parent=5 // pred_check_branch
        %795 = sbr.rel (%p793) target = $region44
      $region43: #{qv1_forward.1} parent=5 // pred_region
        %s796 = ssub.s32 %s10, 2
        // Predicated region
        $region45: #{qv1_forward.1} parent=43 // pred_check
          %p797 = pneg %p107
        $region46: #{qv1_forward.1} parent=43 // pred_check_branch
          %799 = sbr.rel (%p797) target = $region48
        $region47: #{qv1_forward.1} parent=43 // pred_region
          %p800 = scmp.lt.s32.totalorder %s16, 1
          %s801 = scalar_select %p800, %s16, 1
          %s802 = scalar_lea.vmem %s3, %s801
        $region48: #{qv1_forward.1} parent=43 // pred_fallthru
          _
      $region44: #{qv1_forward.1} parent=5 // pred_fallthru
        _
    $region6: #{qv1_forward.1} parent=1 // loop_footer
      %s14 = sadd.s32 1, %s10
    $region7: #{qv1_forward.1} parent=1 // loop_footer_branch
      %9 = sbr.rel target = $region3
    $region8: #{qv1_forward.1} parent=1 // loop_exit
      _
    %803 = vsyncpa [#allocation3], 1
    %s804 = scalar_lea.sflag [#allocation3], 1
    %805 = vsyncpa %s804, 1

</llo_original>
